<compile_context>
chip_gen: v5e
topology: v5e:2x2
jax: 0.10.0
libtpu: 0.0.40
codegen_flags: <defaults>
</compile_context>

<pallas_src>
import functools
import math

import jax
import jax.numpy as jnp
from jax.experimental import pallas as pl
from jax.experimental.pallas import tpu as pltpu


def _round_up(x, m):
    return ((x + m - 1) // m) * m


def _choose_tile_rows(b, cpad, itemsize, nsplit, max_tile_bytes):
    # Size the row tile purely by bytes (no artificial row cap), then bound it by
    # ceil(b / nsplit) so row padding never inflates the logits read.
    tb = max_tile_bytes // max(cpad * itemsize, 1)
    cap = _round_up(max(1, -(-b // nsplit)), 8)
    tb = max(8, min(tb, cap))
    return (tb // 8) * 8


def _fused_masked_ce_kernel(logit_ref, meta_ref, out_ref, acc_ref, *, task_ints):
    """Grid (nsplit, nb).

    logit_ref: (tb, cpad) block of the class-concatenated logits.
    meta_ref : untiled VMEM (b_pad, 4) int32 = [task_id, target_col, seg_start,
               seg_end] per row (padded rows are all -1 / empty segment).
    out_ref  : (8, 128) block per split; lane t holds task t's masked CE sum.
    acc_ref  : SMEM (n_tasks,) f32 scalar accumulators.
    """
    p = pl.program_id(0)
    i = pl.program_id(1)
    nb = pl.num_programs(1)
    tb, cpad = logit_ref.shape
    n_tasks = len(task_ints)

    @pl.when(i == 0)
    def _init():
        for t in range(n_tasks):
            acc_ref[t] = jnp.float32(0.0)

    logit = logit_ref[...].astype(jnp.float32)                       # (tb, cpad)

    row_start = pl.multiple_of((p * nb + i) * tb, 8)
    meta = meta_ref[pl.ds(row_start, tb), :]                         # (tb, 4)
    tid = meta[:, 0:1]
    tcol = meta[:, 1:2]
    roff = meta[:, 2:3]
    rend = meta[:, 3:4]

    # Row-wise cross entropy restricted to the row's own task class segment:
    #   ce = logsumexp(logit[seg]) - logit[target_col]
    cls = jax.lax.broadcasted_iota(jnp.int32, (tb, cpad), 1)
    seg = (cls >= roff) & (cls < rend)
    masked = jnp.where(seg, logit, jnp.float32(-1e30))               # finite fill
    m = jnp.max(masked, axis=-1, keepdims=True)                      # (tb, 1)
    sumexp = jnp.sum(jnp.exp(masked - m), axis=-1, keepdims=True)    # >= 1 on valid rows
    lse = m + jnp.log(sumexp)
    tgt_logit = jnp.sum(jnp.where(cls == tcol, logit, 0.0),
                        axis=-1, keepdims=True)
    ce = lse - tgt_logit                                             # (tb, 1)

    # T scalar accumulations into SMEM (full reduce per task; tiny store traffic).
    for t, tint in enumerate(task_ints):
        acc_ref[t] += jnp.sum(jnp.where(tid == tint, ce, jnp.float32(0.0)))

    @pl.when(i == nb - 1)
    def _finalize():
        lane = jax.lax.broadcasted_iota(jnp.int32, out_ref.shape, 1)
        vals = jnp.zeros(out_ref.shape, jnp.float32)
        for t in range(n_tasks):
            vals = jnp.where(lane == t, acc_ref[t], vals)
        out_ref[...] = vals


def multi_task_loss_with_uncertainty(logits, targets, task_type_id, log_variance,
                                     task_name2int, *, return_dict=False,
                                     nsplit=1, max_tile_bytes=2 * 1024 * 1024):
    """Pallas TPU implementation of MultiTaskLossWithUncertainty.forward
    (sample_loss = mean softmax cross-entropy).  On v7x pass nsplit=2 and
    max_tile_bytes=4*1024*1024."""
    task_names = list(logits.keys())
    task_ints = tuple(int(task_name2int[n]) for n in task_names)
    n_tasks = len(task_names)
    assert 1 <= n_tasks <= 128
    b = int(targets.shape[0])

    tid = task_type_id.astype(jnp.int32)
    tgt = targets.astype(jnp.int32)

    # Class-axis concatenation (lane-dense slab) + per-row meta table.
    logit_cat = jnp.concatenate([logits[n] for n in task_names], axis=1)
    csum = int(logit_cat.shape[1])
    cpad = _round_up(csum, 128)

    row_off = jnp.zeros((b,), jnp.int32)
    row_cnt = jnp.zeros((b,), jnp.int32)
    off = 0
    for n, tint in zip(task_names, task_ints):
        c = int(logits[n].shape[-1])
        sel = tid == tint
        row_off = jnp.where(sel, off, row_off)
        row_cnt = jnp.where(sel, c, row_cnt)
        off += c
    row_end = row_off + row_cnt
    # NOTE: torch ignore_index semantics are not implemented; targets are assumed
    # to be valid class indices for the row's task (matches the reference).
    tcol = jnp.where(row_cnt > 0, tgt + row_off, -1)
    meta = jnp.stack([tid, tcol, row_off, row_end], axis=1)           # (b, 4)

    itemsize = jnp.dtype(logit_cat.dtype).itemsize
    tb = _choose_tile_rows(b, cpad, itemsize, nsplit, max_tile_bytes)
    nb = -(-b // (tb * nsplit))
    b_pad = nb * tb * nsplit

    if cpad != csum or b_pad != b:
        logit_cat = jnp.pad(logit_cat, ((0, b_pad - b), (0, cpad - csum)))
    if b_pad != b:
        # Padded rows: task_id = -1 (never matches a task id), empty segment.
        meta = jnp.pad(meta, ((0, b_pad - b), (0, 0)), constant_values=-1)

    kernel = functools.partial(_fused_masked_ce_kernel, task_ints=task_ints)
    cost = pl.CostEstimate(
        flops=8 * b_pad * cpad,
        transcendentals=b_pad * cpad + b_pad,
        bytes_accessed=b_pad * cpad * itemsize + b_pad * 4 * 4 + nsplit * 8 * 128 * 4,
    )

    out = pl.pallas_call(
        kernel,
        grid=(nsplit, nb),
        in_specs=[
            pl.BlockSpec((tb, cpad), lambda p, i: (p * nb + i, 0)),
            # Per-row meta: one upfront DMA, resident in VMEM, sliced with pl.ds.
            pl.BlockSpec(memory_space=pltpu.MemorySpace.VMEM),
        ],
        out_specs=pl.BlockSpec((8, 128), lambda p, i: (p, 0)),
        out_shape=jax.ShapeDtypeStruct((nsplit * 8, 128), jnp.float32),
        scratch_shapes=[pltpu.SMEM((n_tasks,), jnp.float32)],
        compiler_params=pltpu.CompilerParams(
            dimension_semantics=("parallel", "arbitrary"),
            # Above v5e's 16 MiB scoped default, below v7x's 64 MiB physical VMEM.
            vmem_limit_bytes=48 * 1024 * 1024,
        ),
        cost_estimate=cost,
    )(logit_cat, meta)

    # Per-split per-task masked CE sums live in lanes [0, n_tasks) of each block.
    sums = out.reshape(nsplit, 8, 128)[:, 0, :n_tasks].sum(axis=0)    # (T,)

    # Counts don't depend on logits: O(B) int work, done once outside the kernel.
    cnts = jnp.stack([jnp.sum((tid == ti).astype(jnp.float32)) for ti in task_ints])

    # Uncertainty combine over T scalars: plain jnp (XLA fuses this trivially).
    lv = log_variance.astype(jnp.float32)
    weights = jnp.exp(-lv)
    mean_ce = sums / cnts                               # NaN when a task is empty
    contrib = mean_ce * weights + 0.5 * lv              # log(sqrt(1/w)) == 0.5*lv
    loss = jnp.sum(jnp.where(cnts > 0, contrib, 0.0))   # NaN-skip (torch behavior)

    if return_dict:
        ret = {"loss": loss}
        for idx, name in enumerate(task_name2int):
            ret["weight_" + name] = weights[idx]
        return ret
    return loss


def _reference_loss(logits, targets, task_type_id, log_variance, task_name2int):
    """Pure-JAX reference mirroring the PyTorch module (mean-CE sample loss)."""
    lv = log_variance.astype(jnp.float32)
    total = jnp.float32(0.0)
    for i, (name, logit) in enumerate(logits.items()):
        c = logit.shape[-1]
        lf = logit.astype(jnp.float32)
        mask = task_type_id == task_name2int[name]
        m = jnp.max(lf, axis=-1, keepdims=True)
        lse = (m + jnp.log(jnp.sum(jnp.exp(lf - m), axis=-1, keepdims=True)))[:, 0]
        cls = jnp.arange(c, dtype=jnp.int32)[None, :]
        tgt_logit = jnp.sum(
            jnp.where(cls == targets[:, None].astype(jnp.int32), lf, 0.0), axis=-1)
        ce = lse - tgt_logit
        cnt = jnp.sum(mask.astype(jnp.float32))
        loss = jnp.sum(jnp.where(mask, ce, 0.0)) / cnt        # NaN if task empty
        contrib = loss * jnp.exp(-lv[i]) + 0.5 * lv[i]
        total = total + jnp.where(jnp.isnan(loss), 0.0, contrib)
    return total


if __name__ == "__main__":
    key = jax.random.PRNGKey(0)
    k_logit, k_task, k_tgt = jax.random.split(key, 3)

    batch = 32
    task_name2int = {"task_a": 0, "task_b": 1, "task_c": 2}
    num_classes = {"task_a": 8, "task_b": 16, "task_c": 12}

    logits = {
        name: jax.random.normal(jax.random.fold_in(k_logit, i),
                                (batch, num_classes[name]), dtype=jnp.float32)
        for i, name in enumerate(task_name2int)
    }
    # Only tasks 0 and 1 appear -> task_c has an empty mask (exercises NaN-skip).
    task_type_id = jax.random.randint(k_task, (batch,), 0, 2, dtype=jnp.int32)
    classes_per_sample = jnp.array(
        [num_classes[n] for n in task_name2int], dtype=jnp.int32)[task_type_id]
    targets = jax.random.randint(k_tgt, (batch,), 0, 1 << 30,
                                 dtype=jnp.int32) % classes_per_sample
    log_variance = jnp.full((len(task_name2int),), math.log(2.0), dtype=jnp.float32)

    loss = multi_task_loss_with_uncertainty(
        logits, targets, task_type_id, log_variance, task_name2int)
    loss = jax.block_until_ready(loss)

    ref = _reference_loss(logits, targets, task_type_id, log_variance, task_name2int)
    if bool(jnp.allclose(loss, ref, rtol=1e-5, atol=1e-5)):
        print("KERNEL_OK")
    else:
        print(f"MISMATCH: pallas={loss} ref={ref}")
</pallas_src>

<mosaic_0001>
module attributes {stable_mosaic.version = 11 : i64} {
  func.func @_fused_masked_ce_kernel(%arg0: i32, %arg1: i32, %arg2: memref<32x128xf32, #tpu.memory_space<vmem>>, %arg3: memref<32x4xi32, #tpu.memory_space<vmem>>, %arg4: memref<8x128xf32, #tpu.memory_space<vmem>>, %arg5: memref<3xf32, #tpu.memory_space<smem>>) attributes {dimension_semantics = [#tpu.dimension_semantics<parallel>, #tpu.dimension_semantics<arbitrary>], iteration_bounds = array<i64: 1, 1>, scalar_prefetch = 0 : i64, scratch_operands = 1 : i64, tpu.core_type = #tpu.core_type<tc>, window_params = [{transform_indices = @transform_0, window_bounds = array<i64: 32, 128>}, {pipeline_mode = #tpu.pipeline_mode<synchronous>, transform_indices = @transform_1, window_bounds = array<i64: 32, 4>}, {transform_indices = @transform_2, window_bounds = array<i64: 8, 128>}]} {
    %c0_i32 = arith.constant 0 : i32
    %0 = arith.cmpi eq, %arg1, %c0_i32 : i32
    %1 = arith.extui %0 : i1 to i32
    %c0_i32_0 = arith.constant 0 : i32
    %2 = arith.cmpi ne, %1, %c0_i32_0 : i32
    scf.if %2 {
      %cst_21 = arith.constant 0.000000e+00 : f32
      %c0_22 = arith.constant 0 : index
      %74 = memref.load %arg5[%c0_22] : memref<3xf32, #tpu.memory_space<smem>>
      memref.store %cst_21, %arg5[%c0_22] : memref<3xf32, #tpu.memory_space<smem>>
      %cst_23 = arith.constant 0.000000e+00 : f32
      %c1_24 = arith.constant 1 : index
      %75 = memref.load %arg5[%c1_24] : memref<3xf32, #tpu.memory_space<smem>>
      memref.store %cst_23, %arg5[%c1_24] : memref<3xf32, #tpu.memory_space<smem>>
      %cst_25 = arith.constant 0.000000e+00 : f32
      %c2_26 = arith.constant 2 : index
      %76 = memref.load %arg5[%c2_26] : memref<3xf32, #tpu.memory_space<smem>>
      memref.store %cst_25, %arg5[%c2_26] : memref<3xf32, #tpu.memory_space<smem>>
    } else {
    }
    %c0 = arith.constant 0 : index
    %c0_1 = arith.constant 0 : index
    %3 = vector.load %arg2[%c0, %c0_1] : memref<32x128xf32, #tpu.memory_space<vmem>>, vector<32x128xf32>
    %c1_i32 = arith.constant 1 : i32
    %4 = arith.muli %arg0, %c1_i32 : i32
    %5 = arith.addi %4, %arg1 : i32
    %c32_i32 = arith.constant 32 : i32
    %6 = arith.muli %5, %c32_i32 : i32
    %7 = tpu.assume_multiple %6, 8 : i32
    %8 = arith.index_cast %7 : i32 to index
    %c0_2 = arith.constant 0 : index
    %9 = vector.load %arg3[%8, %c0_2] : memref<32x4xi32, #tpu.memory_space<vmem>>, vector<32x4xi32>
    %10 = vector.extract_strided_slice %9 {offsets = [0, 0], sizes = [32, 1], strides = [1, 1]} : vector<32x4xi32> to vector<32x1xi32>
    %11 = vector.extract_strided_slice %9 {offsets = [0, 1], sizes = [32, 1], strides = [1, 1]} : vector<32x4xi32> to vector<32x1xi32>
    %12 = vector.extract_strided_slice %9 {offsets = [0, 2], sizes = [32, 1], strides = [1, 1]} : vector<32x4xi32> to vector<32x1xi32>
    %13 = vector.extract_strided_slice %9 {offsets = [0, 3], sizes = [32, 1], strides = [1, 1]} : vector<32x4xi32> to vector<32x1xi32>
    %14 = tpu.iota {dimensions = array<i32: 1>} : vector<32x128xi32>
    %15 = vector.broadcast %12 : vector<32x1xi32> to vector<32x128xi32>
    %16 = arith.cmpi sge, %14, %15 : vector<32x128xi32>
    %17 = vector.broadcast %13 : vector<32x1xi32> to vector<32x128xi32>
    %18 = arith.cmpi slt, %14, %17 : vector<32x128xi32>
    %19 = arith.andi %16, %18 : vector<32x128xi1>
    %cst = arith.constant -1.000000e+30 : f32
    %20 = vector.broadcast %cst : f32 to vector<32x128xf32>
    %21 = arith.select %19, %3, %20 : vector<32x128xi1>, vector<32x128xf32>
    %cst_3 = arith.constant dense<0xFF800000> : vector<32xf32>
    %22 = vector.multi_reduction <maximumf>, %21, %cst_3 [1] : vector<32x128xf32> to vector<32xf32>
    %23 = vector.shape_cast %22 : vector<32xf32> to vector<32x1xf32>
    %24 = vector.broadcast %23 : vector<32x1xf32> to vector<32x128xf32>
    %25 = arith.subf %21, %24 : vector<32x128xf32>
    %26 = math.exp %25 : vector<32x128xf32>
    %cst_4 = arith.constant dense<0.000000e+00> : vector<32xf32>
    %27 = vector.multi_reduction <add>, %26, %cst_4 [1] : vector<32x128xf32> to vector<32xf32>
    %28 = vector.shape_cast %27 : vector<32xf32> to vector<32x1xf32>
    %29 = math.log %28 : vector<32x1xf32>
    %30 = arith.addf %23, %29 : vector<32x1xf32>
    %31 = vector.broadcast %11 : vector<32x1xi32> to vector<32x128xi32>
    %32 = arith.cmpi eq, %14, %31 : vector<32x128xi32>
    %cst_5 = arith.constant 0.000000e+00 : f32
    %33 = vector.broadcast %cst_5 : f32 to vector<32x128xf32>
    %34 = arith.select %32, %3, %33 : vector<32x128xi1>, vector<32x128xf32>
    %cst_6 = arith.constant dense<0.000000e+00> : vector<32xf32>
    %35 = vector.multi_reduction <add>, %34, %cst_6 [1] : vector<32x128xf32> to vector<32xf32>
    %36 = vector.shape_cast %35 : vector<32xf32> to vector<32x1xf32>
    %37 = arith.subf %30, %36 : vector<32x1xf32>
    %c0_7 = arith.constant 0 : index
    %38 = memref.load %arg5[%c0_7] : memref<3xf32, #tpu.memory_space<smem>>
    %c0_i32_8 = arith.constant 0 : i32
    %39 = vector.broadcast %c0_i32_8 : i32 to vector<32x1xi32>
    %40 = arith.cmpi eq, %10, %39 : vector<32x1xi32>
    %cst_9 = arith.constant 0.000000e+00 : f32
    %41 = vector.broadcast %cst_9 : f32 to vector<32x1xf32>
    %42 = arith.select %40, %37, %41 : vector<32x1xi1>, vector<32x1xf32>
    %43 = vector.shape_cast %42 : vector<32x1xf32> to vector<1x32x1xf32>
    %cst_10 = arith.constant dense<0.000000e+00> : vector<1xf32>
    %44 = vector.multi_reduction <add>, %43, %cst_10 [1, 2] : vector<1x32x1xf32> to vector<1xf32>
    %45 = vector.shape_cast %44 : vector<1xf32> to vector<1x1x1xf32>
    %46 = vector.extract %45[0, 0, 0] : f32 from vector<1x1x1xf32>
    %47 = arith.addf %38, %46 : f32
    %c0_11 = arith.constant 0 : index
    %48 = memref.load %arg5[%c0_11] : memref<3xf32, #tpu.memory_space<smem>>
    memref.store %47, %arg5[%c0_11] : memref<3xf32, #tpu.memory_space<smem>>
    %c1 = arith.constant 1 : index
    %49 = memref.load %arg5[%c1] : memref<3xf32, #tpu.memory_space<smem>>
    %c1_i32_12 = arith.constant 1 : i32
    %50 = vector.broadcast %c1_i32_12 : i32 to vector<32x1xi32>
    %51 = arith.cmpi eq, %10, %50 : vector<32x1xi32>
    %cst_13 = arith.constant 0.000000e+00 : f32
    %52 = vector.broadcast %cst_13 : f32 to vector<32x1xf32>
    %53 = arith.select %51, %37, %52 : vector<32x1xi1>, vector<32x1xf32>
    %54 = vector.shape_cast %53 : vector<32x1xf32> to vector<1x32x1xf32>
    %cst_14 = arith.constant dense<0.000000e+00> : vector<1xf32>
    %55 = vector.multi_reduction <add>, %54, %cst_14 [1, 2] : vector<1x32x1xf32> to vector<1xf32>
    %56 = vector.shape_cast %55 : vector<1xf32> to vector<1x1x1xf32>
    %57 = vector.extract %56[0, 0, 0] : f32 from vector<1x1x1xf32>
    %58 = arith.addf %49, %57 : f32
    %c1_15 = arith.constant 1 : index
    %59 = memref.load %arg5[%c1_15] : memref<3xf32, #tpu.memory_space<smem>>
    memref.store %58, %arg5[%c1_15] : memref<3xf32, #tpu.memory_space<smem>>
    %c2 = arith.constant 2 : index
    %60 = memref.load %arg5[%c2] : memref<3xf32, #tpu.memory_space<smem>>
    %c2_i32 = arith.constant 2 : i32
    %61 = vector.broadcast %c2_i32 : i32 to vector<32x1xi32>
    %62 = arith.cmpi eq, %10, %61 : vector<32x1xi32>
    %cst_16 = arith.constant 0.000000e+00 : f32
    %63 = vector.broadcast %cst_16 : f32 to vector<32x1xf32>
    %64 = arith.select %62, %37, %63 : vector<32x1xi1>, vector<32x1xf32>
    %65 = vector.shape_cast %64 : vector<32x1xf32> to vector<1x32x1xf32>
    %cst_17 = arith.constant dense<0.000000e+00> : vector<1xf32>
    %66 = vector.multi_reduction <add>, %65, %cst_17 [1, 2] : vector<1x32x1xf32> to vector<1xf32>
    %67 = vector.shape_cast %66 : vector<1xf32> to vector<1x1x1xf32>
    %68 = vector.extract %67[0, 0, 0] : f32 from vector<1x1x1xf32>
    %69 = arith.addf %60, %68 : f32
    %c2_18 = arith.constant 2 : index
    %70 = memref.load %arg5[%c2_18] : memref<3xf32, #tpu.memory_space<smem>>
    memref.store %69, %arg5[%c2_18] : memref<3xf32, #tpu.memory_space<smem>>
    %c0_i32_19 = arith.constant 0 : i32
    %71 = arith.cmpi eq, %arg1, %c0_i32_19 : i32
    %72 = arith.extui %71 : i1 to i32
    %c0_i32_20 = arith.constant 0 : i32
    %73 = arith.cmpi ne, %72, %c0_i32_20 : i32
    scf.if %73 {
      %74 = tpu.iota {dimensions = array<i32: 1>} : vector<8x128xi32>
      %cst_21 = arith.constant 0.000000e+00 : f32
      %75 = vector.broadcast %cst_21 : f32 to vector<8x128xf32>
      %c0_i32_22 = arith.constant 0 : i32
      %76 = vector.broadcast %c0_i32_22 : i32 to vector<8x128xi32>
      %77 = arith.cmpi eq, %74, %76 : vector<8x128xi32>
      %c0_23 = arith.constant 0 : index
      %78 = memref.load %arg5[%c0_23] : memref<3xf32, #tpu.memory_space<smem>>
      %79 = vector.broadcast %78 : f32 to vector<8x128xf32>
      %80 = arith.select %77, %79, %75 : vector<8x128xi1>, vector<8x128xf32>
      %c1_i32_24 = arith.constant 1 : i32
      %81 = vector.broadcast %c1_i32_24 : i32 to vector<8x128xi32>
      %82 = arith.cmpi eq, %74, %81 : vector<8x128xi32>
      %c1_25 = arith.constant 1 : index
      %83 = memref.load %arg5[%c1_25] : memref<3xf32, #tpu.memory_space<smem>>
      %84 = vector.broadcast %83 : f32 to vector<8x128xf32>
      %85 = arith.select %82, %84, %80 : vector<8x128xi1>, vector<8x128xf32>
      %c2_i32_26 = arith.constant 2 : i32
      %86 = vector.broadcast %c2_i32_26 : i32 to vector<8x128xi32>
      %87 = arith.cmpi eq, %74, %86 : vector<8x128xi32>
      %c2_27 = arith.constant 2 : index
      %88 = memref.load %arg5[%c2_27] : memref<3xf32, #tpu.memory_space<smem>>
      %89 = vector.broadcast %88 : f32 to vector<8x128xf32>
      %90 = arith.select %87, %89, %85 : vector<8x128xi1>, vector<8x128xf32>
      %c0_28 = arith.constant 0 : index
      %c0_29 = arith.constant 0 : index
      %91 = vector.load %arg4[%c0_28, %c0_29] : memref<8x128xf32, #tpu.memory_space<vmem>>, vector<8x128xf32>
      tpu.vector_store %arg4[%c0_28, %c0_29], %90 {strides = array<i32>} : memref<8x128xf32, #tpu.memory_space<vmem>>, vector<8x128xf32>,
    } else {
    }
    return
  }
  func.func @transform_0(%arg0: i32, %arg1: i32) -> (i32, i32) {
    %c1_i32 = arith.constant 1 : i32
    %0 = arith.muli %arg0, %c1_i32 : i32
    %1 = arith.addi %0, %arg1 : i32
    %c0_i32 = arith.constant 0 : i32
    %c0_i32_0 = arith.constant 0 : i32
    return %1, %c0_i32 : i32, i32
  }
  func.func @transform_1(%arg0: i32, %arg1: i32) -> (i32, i32) {
    %c0_i32 = arith.constant 0 : i32
    %c0_i32_0 = arith.constant 0 : i32
    %c0_i32_1 = arith.constant 0 : i32
    return %c0_i32, %c0_i32_0 : i32, i32
  }
  func.func @transform_2(%arg0: i32, %arg1: i32) -> (i32, i32) {
    %c0_i32 = arith.constant 0 : i32
    %c0_i32_0 = arith.constant 0 : i32
    return %arg0, %c0_i32 : i32, i32
  }
}

</mosaic_0001>

<llo_original>
// kernel: tpu_custom_call.1
$region0: #{tpu_custom_call.1}
  #allocation0 [shape = 'u32[]', space=smem, size = 0x4, offset = 0x4, fixed_abs, tag = 'smem constant byte address 0x4 - core index']
  #allocation1 [shape = 'u32[72,128]{1,0:T(1,128)}', space=vmem, size = 0x9000, scoped, tag = 'internal scratch']
  #allocation2 [shape = 'f32[3]{0:T(128)}', space=smem, size = 0x200, scoped, tag = 'scratch operand']
  %s0 = inlined_call_operand.vmem [shape: f32[32,128], index: 0, kind: input, shape index: {}]
  %s1 = inlined_call_operand.vmem [shape: s32[32,4], index: 1, kind: input, shape index: {}]
  %s2 = inlined_call_operand.hbm [shape: f32[8,128], index: 2, kind: output, shape index: {}]
  %s3 = sld [smem:[#allocation0]]
  $region26: #{tpu_custom_call.1} parent=0
    _
  %s5 = ssub.s32 1, %s3
  %s6 = scalar_select 0, %s5, %s3
  $region1: #{tpu_custom_call.1} parent=0
    #allocation3 [shape = 'u8[4096]{0}', space=vmem, size = 0x1000, scoped, tag = 'output window, operand 0, single buffered']
    #allocation4 [shape = 's32[1]{0}', space=sflag, size = 0x4, scoped, tag = 'scoped memory for tpu_custom_call.1']
    %7 = vsyncpa [#allocation4], 0
    // Predicated region
    $region2: #{tpu_custom_call.1} parent=1 // pred_check
      _
    $region3: #{tpu_custom_call.1} parent=1 // pred_check_branch
      %9 = sbr.rel (0) target = $region5
    $region4: #{tpu_custom_call.1} parent=1 // pred_region
      %s10 = sadd.s32 0, 0
      %s11 = smul.u32 4, %s10
      %p12 = scmp.lt.s32.totalorder %s11, 3
      %s13 = scalar_select %p12, %s11, 3
      %s14 = smul.addr %s13, 8
      %s15 = scalar_lea.vmem %s0, %s14
      %s16 = sadd.s32 0, 0
      %s17 = smul.u32 4, %s16
    $region5: #{tpu_custom_call.1} parent=1 // pred_fallthru
      _
    // Predicated region
    $region6: #{tpu_custom_call.1} parent=1 // pred_check
      _
    $region7: #{tpu_custom_call.1} parent=1 // pred_check_branch
      %19 = sbr.rel (0) target = $region9
    $region8: #{tpu_custom_call.1} parent=1 // pred_region
      _
    $region9: #{tpu_custom_call.1} parent=1 // pred_fallthru
      _
    %s20 = sadd.s32 0, 0
    %s21 = smul.u32 4, %s20
    %p22 = scmp.lt.s32.totalorder %s21, 3
    %s23 = scalar_select %p22, %s21, 3
    %s24 = smul.addr %s23, 8
    %s25 = scalar_lea.vmem %s0, %s24
    %s26 = sadd.s32 0, 0
    %s27 = smul.u32 4, %s26
    %p28 = scmp.lt.s32.totalorder %s27, 3
    %s29 = scalar_select %p28, %s27, 3
    %s30 = smul.addr %s29, 8
    %s31 = scalar_lea.vmem %s0, %s30
    %s32 = sadd.s32 0, 0
    %s33 = smul.u32 4, %s32
    %p34 = scmp.eq.s32.totalorder 0, 0
    // Predicated region
    $region10: #{tpu_custom_call.1} parent=1 // pred_check
      %p35 = pneg %p34
    $region11: #{tpu_custom_call.1} parent=1 // pred_check_branch
      %37 = sbr.rel (%p35) target = $region13
    $region12: #{tpu_custom_call.1} parent=1 // pred_region
      %s38 = scalar_lea.smem [#allocation2], 0
      %39 = sst [smem:[%s38]] 0.0
      %s40 = scalar_lea.smem [#allocation2], 1
      %41 = sst [smem:[%s40]] 0.0
      %s42 = scalar_lea.smem [#allocation2], 2
      %43 = sst [smem:[%s42]] 0.0
    $region13: #{tpu_custom_call.1} parent=1 // pred_fallthru
      _
    %v44 = vld [vmem:[%s31] sm:$0xff]
    %v45 = vld [vmem:[%s31 + $0x8] sm:$0xff]
    %v46 = vld [vmem:[%s31 + $0x10] sm:$0xff]
    %v47 = vld [vmem:[%s31 + $0x18] sm:$0xff]
    %s48 = sadd.s32 0, 0
    %s49 = smul.u32 %s48, 32
    %s50 = scalar_lea.vmem %s1, %s49
    %v51 = vld [vmem:[%s50] sm:$0xff]
    %v52 = vld [vmem:[%s50 + $0x8] sm:$0xff]
    %v53 = vld [vmem:[%s50 + $0x10] sm:$0xff]
    %v54 = vld [vmem:[%s50 + $0x18] sm:$0xff]
    %v55 = vlaneseq
    %v56 = vand.u32 %v55, 127
    %57 = vset.pattern.permute.xlu0 2
    %58 = vperm.xlu0 %57, %v51
    %v59 = vpop.permute.xlu0 %58
    %60 = vset.pattern.permute.xlu0 2
    %61 = vperm.xlu0 %60, %v52
    %v62 = vpop.permute.xlu0 %61
    %63 = vset.pattern.permute.xlu0 2
    %64 = vperm.xlu0 %63, %v53
    %v65 = vpop.permute.xlu0 %64
    %66 = vset.pattern.permute.xlu0 2
    %67 = vperm.xlu0 %66, %v54
    %v68 = vpop.permute.xlu0 %67
    %vm69 = vcmp.ge.s32.totalorder %v56, %v59
    %vm70 = vcmp.ge.s32.totalorder %v56, %v62
    %vm71 = vcmp.ge.s32.totalorder %v56, %v65
    %vm72 = vcmp.ge.s32.totalorder %v56, %v68
    %73 = vset.pattern.permute.xlu0 3
    %74 = vperm.xlu0 %73, %v51
    %v75 = vpop.permute.xlu0 %74
    %76 = vset.pattern.permute.xlu0 3
    %77 = vperm.xlu0 %76, %v52
    %v78 = vpop.permute.xlu0 %77
    %79 = vset.pattern.permute.xlu0 3
    %80 = vperm.xlu0 %79, %v53
    %v81 = vpop.permute.xlu0 %80
    %82 = vset.pattern.permute.xlu0 3
    %83 = vperm.xlu0 %82, %v54
    %v84 = vpop.permute.xlu0 %83
    %vm85 = vcmp.lt.s32.totalorder %v56, %v75
    %vm86 = vcmp.lt.s32.totalorder %v56, %v78
    %vm87 = vcmp.lt.s32.totalorder %v56, %v81
    %vm88 = vcmp.lt.s32.totalorder %v56, %v84
    %vm89 = vmand %vm69, %vm85
    %vm90 = vmand %vm70, %vm86
    %vm91 = vmand %vm71, %vm87
    %vm92 = vmand %vm72, %vm88
    %v93 = vsel %vm89, %v44, -1e+30
    %v94 = vsel %vm90, %v45, -1e+30
    %v95 = vsel %vm91, %v46, -1e+30
    %v96 = vsel %vm92, %v47, -1e+30
    %97 = vmax.xlane.f32.xlu0 %v93
    %v98 = vpop.xlane.xlu0 %97
    %99 = vmax.xlane.f32.xlu0 %v94
    %v100 = vpop.xlane.xlu0 %99
    %101 = vmax.xlane.f32.xlu0 %v95
    %v102 = vpop.xlane.xlu0 %101
    %103 = vmax.xlane.f32.xlu0 %v96
    %v104 = vpop.xlane.xlu0 %103
    %v105 = vsub.f32 %v93, %v98
    %v106 = vsub.f32 %v94, %v100
    %v107 = vsub.f32 %v95, %v102
    %v108 = vsub.f32 %v96, %v104
    %v109 = vmul.f32 %v105, 1.442695
    %v110 = vpow.pop %v109
    %v111 = vmul.f32 %v106, 1.442695
    %v112 = vpow.pop %v111
    %v113 = vmul.f32 %v107, 1.442695
    %v114 = vpow.pop %v113
    %v115 = vmul.f32 %v108, 1.442695
    %v116 = vpow.pop %v115
    %117 = vadd.xlane.f32.xlu0 %v110
    %v118 = vpop.xlane.xlu0 %117
    %119 = vadd.xlane.f32.xlu0 %v112
    %v120 = vpop.xlane.xlu0 %119
    %121 = vadd.xlane.f32.xlu0 %v114
    %v122 = vpop.xlane.xlu0 %121
    %123 = vadd.xlane.f32.xlu0 %v116
    %v124 = vpop.xlane.xlu0 %123
    %v125 = vlog2.pop %v118
    %v126 = vmul.f32 %v125, 0.6931472
    %v127 = vlog2.pop %v120
    %v128 = vmul.f32 %v127, 0.6931472
    %v129 = vlog2.pop %v122
    %v130 = vmul.f32 %v129, 0.6931472
    %v131 = vlog2.pop %v124
    %v132 = vmul.f32 %v131, 0.6931472
    %v133 = vadd.f32 %v98, %v126
    %v134 = vadd.f32 %v100, %v128
    %v135 = vadd.f32 %v102, %v130
    %v136 = vadd.f32 %v104, %v132
    %137 = vset.pattern.permute.xlu0 1
    %138 = vperm.xlu0 %137, %v51
    %v139 = vpop.permute.xlu0 %138
    %140 = vset.pattern.permute.xlu0 1
    %141 = vperm.xlu0 %140, %v52
    %v142 = vpop.permute.xlu0 %141
    %143 = vset.pattern.permute.xlu0 1
    %144 = vperm.xlu0 %143, %v53
    %v145 = vpop.permute.xlu0 %144
    %146 = vset.pattern.permute.xlu0 1
    %147 = vperm.xlu0 %146, %v54
    %v148 = vpop.permute.xlu0 %147
    %vm149 = vcmp.eq.s32.totalorder %v56, %v139
    %vm150 = vcmp.eq.s32.totalorder %v56, %v142
    %vm151 = vcmp.eq.s32.totalorder %v56, %v145
    %vm152 = vcmp.eq.s32.totalorder %v56, %v148
    %v153 = vsel %vm149, %v44, 0.0
    %v154 = vsel %vm150, %v45, 0.0
    %v155 = vsel %vm151, %v46, 0.0
    %v156 = vsel %vm152, %v47, 0.0
    %157 = vadd.xlane.f32.xlu0 %v153
    %v158 = vpop.xlane.xlu0 %157
    %159 = vadd.xlane.f32.xlu0 %v154
    %v160 = vpop.xlane.xlu0 %159
    %161 = vadd.xlane.f32.xlu0 %v155
    %v162 = vpop.xlane.xlu0 %161
    %163 = vadd.xlane.f32.xlu0 %v156
    %v164 = vpop.xlane.xlu0 %163
    %v165 = vsub.f32 %v133, %v158
    %v166 = vsub.f32 %v134, %v160
    %v167 = vsub.f32 %v135, %v162
    %v168 = vsub.f32 %v136, %v164
    %s169 = sld [smem:[#allocation2]]
    %vm170 = vcmp.eq.s32.totalorder %v51, 0
    %vm171 = vcmp.eq.s32.totalorder %v52, 0
    %vm172 = vcmp.eq.s32.totalorder %v53, 0
    %vm173 = vcmp.eq.s32.totalorder %v54, 0
    %v174 = vsel %vm170, %v165, 0.0
    %v175 = vsel %vm171, %v166, 0.0
    %v176 = vsel %vm172, %v167, 0.0
    %v177 = vsel %vm173, %v168, 0.0
    %vm178 = vcmask 7168
    %v179 = vsel %vm178, %v174, 0.0
    %v180 = vsel %vm178, %v175, 0.0
    %v181 = vadd.f32 %v179, %v180
    %v182 = vsel %vm178, %v176, 0.0
    %v183 = vadd.f32 %v181, %v182
    %v184 = vsel %vm178, %v177, 0.0
    %v185 = vadd.f32 %v183, %v184
    %186 = vadd.xlane.f32.xlu0 %v185
    %v187 = vpop.xlane.xlu0 %186
    %v188 = vrot.slane %v187, 4
    %v189 = vadd.f32 %v187, %v188
    %v190 = vrot.slane %v189, 2
    %v191 = vadd.f32 %v189, %v190
    %v192 = vrot.slane %v191, 1
    %v193 = vadd.f32 %v191, %v192
    %s194 = vtos %v193
    %s195 = sadd.f32 %s169, %s194
    %s196 = scalar_lea.smem [#allocation2], 0
    %197 = sst [smem:[%s196]] %s195
    %s198 = sld [smem:[#allocation2 + $0x1]]
    %vm199 = vcmp.eq.s32.totalorder %v51, 1
    %vm200 = vcmp.eq.s32.totalorder %v52, 1
    %vm201 = vcmp.eq.s32.totalorder %v53, 1
    %vm202 = vcmp.eq.s32.totalorder %v54, 1
    %v203 = vsel %vm199, %v165, 0.0
    %v204 = vsel %vm200, %v166, 0.0
    %v205 = vsel %vm201, %v167, 0.0
    %v206 = vsel %vm202, %v168, 0.0
    %v207 = vsel %vm178, %v203, 0.0
    %v208 = vsel %vm178, %v204, 0.0
    %v209 = vadd.f32 %v207, %v208
    %v210 = vsel %vm178, %v205, 0.0
    %v211 = vadd.f32 %v209, %v210
    %v212 = vsel %vm178, %v206, 0.0
    %v213 = vadd.f32 %v211, %v212
    %214 = vadd.xlane.f32.xlu0 %v213
    %v215 = vpop.xlane.xlu0 %214
    %v216 = vrot.slane %v215, 4
    %v217 = vadd.f32 %v215, %v216
    %v218 = vrot.slane %v217, 2
    %v219 = vadd.f32 %v217, %v218
    %v220 = vrot.slane %v219, 1
    %v221 = vadd.f32 %v219, %v220
    %s222 = vtos %v221
    %s223 = sadd.f32 %s198, %s222
    %s224 = scalar_lea.smem [#allocation2], 1
    %225 = sst [smem:[%s224]] %s223
    %s226 = sld [smem:[#allocation2 + $0x2]]
    %vm227 = vcmp.eq.s32.totalorder %v51, 2
    %vm228 = vcmp.eq.s32.totalorder %v52, 2
    %vm229 = vcmp.eq.s32.totalorder %v53, 2
    %vm230 = vcmp.eq.s32.totalorder %v54, 2
    %v231 = vsel %vm227, %v165, 0.0
    %v232 = vsel %vm228, %v166, 0.0
    %v233 = vsel %vm229, %v167, 0.0
    %v234 = vsel %vm230, %v168, 0.0
    %v235 = vsel %vm178, %v231, 0.0
    %v236 = vsel %vm178, %v232, 0.0
    %v237 = vadd.f32 %v235, %v236
    %v238 = vsel %vm178, %v233, 0.0
    %v239 = vadd.f32 %v237, %v238
    %v240 = vsel %vm178, %v234, 0.0
    %v241 = vadd.f32 %v239, %v240
    %242 = vadd.xlane.f32.xlu0 %v241
    %v243 = vpop.xlane.xlu0 %242
    %v244 = vrot.slane %v243, 4
    %v245 = vadd.f32 %v243, %v244
    %v246 = vrot.slane %v245, 2
    %v247 = vadd.f32 %v245, %v246
    %v248 = vrot.slane %v247, 1
    %v249 = vadd.f32 %v247, %v248
    %s250 = vtos %v249
    %s251 = sadd.f32 %s226, %s250
    %s252 = scalar_lea.smem [#allocation2], 2
    %253 = sst [smem:[%s252]] %s251
    // Predicated region
    $region14: #{tpu_custom_call.1} parent=1 // pred_check
      %p254 = pneg %p34
    $region15: #{tpu_custom_call.1} parent=1 // pred_check_branch
      %256 = sbr.rel (%p254) target = $region17
    $region16: #{tpu_custom_call.1} parent=1 // pred_region
      %vm257 = vcmp.eq.s32.totalorder %v56, 0
      %s258 = sld [smem:[#allocation2]]
      %v259 = vstv %s258
      %v260 = vsel %vm257, %v259, 0.0
      %vm261 = vcmp.eq.s32.totalorder %v56, 1
      %s262 = sld [smem:[#allocation2 + $0x1]]
      %v263 = vstv %s262
      %v264 = vsel %vm261, %v263, %v260
      %vm265 = vcmp.eq.s32.totalorder %v56, 2
      %s266 = sld [smem:[#allocation2 + $0x2]]
      %v267 = vstv %s266
      %v268 = vsel %vm265, %v267, %v264
      %269 = vst [vmem:[#allocation3] sm:$0xff] %v268
    $region17: #{tpu_custom_call.1} parent=1 // pred_fallthru
      _
    // Predicated region
    $region18: #{tpu_custom_call.1} parent=1 // pred_check
      _
    $region19: #{tpu_custom_call.1} parent=1 // pred_check_branch
      %271 = sbr.rel (0) target = $region21
    $region20: #{tpu_custom_call.1} parent=1 // pred_region
      %273 = vsyncadd [#allocation4], 0
      %s275 = sshll.u32 [#allocation3], 4
      %s276 = int_to_ptr.vmem [resolvable:$true] %s275
      %s277 = sshll.u32 %s2, 4
      %s278 = int_to_ptr.hbm [resolvable:$true] %s277
      %280 = dma.vmem_to_hbm [thread:$0]  %s276, 128, %s278, [#allocation4]
    $region21: #{tpu_custom_call.1} parent=1 // pred_fallthru
      _
    // Predicated region
    $region22: #{tpu_custom_call.1} parent=1 // pred_check
      _
    $region23: #{tpu_custom_call.1} parent=1 // pred_check_branch
      %282 = sbr.rel (0) target = $region25
    $region24: #{tpu_custom_call.1} parent=1 // pred_region
      %284 = dma.done [#allocation4], 128
    $region25: #{tpu_custom_call.1} parent=1 // pred_fallthru
      _
    %285 = vsyncpa [#allocation4], 1

</llo_original>
